<compile_context>
chip_gen: v5e
topology: v5e:2x2
jax: 0.10.0
libtpu: 0.0.40
codegen_flags: <defaults>
</compile_context>

<pallas_src>
import jax
import jax.numpy as jnp
from jax.experimental import pallas as pl
from jax.experimental.pallas import tpu as pltpu

# ---------------- sizes (small, consistent with the forward) ----------------
B = 2        # batch
S = 8        # sequence length
H = 32       # transformer hidden_size
FF = 64      # FFN intermediate size
L = 5        # label_count
LPAD = 128   # lane-dense padded label dim
BPAD = 8     # sublane-dense padded batch dim for the output tile
EPS = 1e-5
H3 = 3 * H

# ---------------- single packed parameter slab layout ----------------
# All fields start at a 128-lane column boundary (or column 0 of their row
# block), so every static slice in the kernel is an aligned zero-cost view.
SLAB_ROWS = H + FF + 8          # 32 weight rows + 64 w2 rows + 8 bias/pool rows = 104
SLAB_COLS = 512

# rows [0:H): input-side weights (H fan-in)
C_WOUT = 0                      # [H, LPAD]   classifier weight (zero-padded L..128)
C_WQKV = 128                    # [H, 3H]     fused QKV (Q block pre-scaled by 1/sqrt(H))
C_WO = 256                      # [H, H]      attention output projection
C_W1 = 384                      # [H, FF]     FFN up-projection
# rows [H : H+FF): FFN down-projection
R_W2 = H                        # [FF, H] at cols [0:H)
# rows [H+FF : H+FF+8): bias / LN / pooling rows
R_BIAS = H + FF                 # = 96
R_BOUT = R_BIAS + 0             # [1, LPAD]
R_B1 = R_BIAS + 1               # [1, FF]
R_B2 = R_BIAS + 2               # [1, H]
R_G1 = R_BIAS + 3               # [1, H]
R_BE1 = R_BIAS + 4              # [1, H]
R_G2 = R_BIAS + 5               # [1, H]
R_BE2 = R_BIAS + 6              # [1, H]
R_POOL = R_BIAS                 # pooling matrix rows [96:104)
C_POOL = 128                    # [BPAD, B*S] at cols [128:128+B*S), entries 1/S


def _layernorm(x, g, b):
    mu = jnp.mean(x, axis=-1, keepdims=True)
    var = jnp.mean((x - mu) ** 2, axis=-1, keepdims=True)
    return (x - mu) * jax.lax.rsqrt(var + EPS) * g + b   # rsqrt -> EUP slot


def transformer_classifier_kernel(
    x_ref,       # [B*S, H]  flattened token embeddings (f32)
    slab_ref,    # [SLAB_ROWS, SLAB_COLS]  packed parameters
    out_ref,     # [BPAD, LPAD]
):
    x = x_ref[...]                                            # [16, 32], already f32

    # Aligned static views straight off the VMEM slab (no per-array DMA).
    wqkv = slab_ref[0:H, C_WQKV:C_WQKV + H3]                  # [H, 3H]
    wo   = slab_ref[0:H, C_WO:C_WO + H]                       # [H, H]
    w1   = slab_ref[0:H, C_W1:C_W1 + FF]                      # [H, FF]
    wout = slab_ref[0:H, C_WOUT:C_WOUT + LPAD]                # [H, LPAD]
    w2   = slab_ref[R_W2:R_W2 + FF, 0:H]                      # [FF, H]

    bout = slab_ref[R_BOUT:R_BOUT + 1, 0:LPAD]                # [1, LPAD]
    b1   = slab_ref[R_B1:R_B1 + 1, 0:FF]
    b2   = slab_ref[R_B2:R_B2 + 1, 0:H]
    g1   = slab_ref[R_G1:R_G1 + 1, 0:H]
    be1  = slab_ref[R_BE1:R_BE1 + 1, 0:H]
    g2   = slab_ref[R_G2:R_G2 + 1, 0:H]
    be2  = slab_ref[R_BE2:R_BE2 + 1, 0:H]
    pool = slab_ref[R_POOL:R_POOL + BPAD, C_POOL:C_POOL + B * S]   # [BPAD, B*S]

    # ---- synthetic stand-in for the opaque transformer_model ----
    # TODO(synk): the real transformer_model is an external pretrained HF module;
    # this is a deterministic single-layer encoder stand-in producing pooled [B, H].

    # Fused QKV: one [B*S, H] x [H, 3H] MXU matmul (Q already scaled by 1/sqrt(H)).
    qkv = jnp.dot(x, wqkv, preferred_element_type=jnp.float32)     # [B*S, 3H]

    # Batch-unrolled single-head attention (B=2, straight-line 2-D matmuls).
    attn_rows = []
    for b in range(B):
        r0, r1 = b * S, (b + 1) * S
        qb = qkv[r0:r1, 0:H]                                       # [S, H]
        kb = qkv[r0:r1, H:2 * H]
        vb = qkv[r0:r1, 2 * H:3 * H]
        sc = jax.lax.dot_general(qb, kb, (((1,), (1,)), ((), ())),
                                 preferred_element_type=jnp.float32)   # [S, S]
        sc = sc - jnp.max(sc, axis=-1, keepdims=True)
        p = jnp.exp(sc)
        # EUP approximate reciprocal for the softmax normalization (frees VALU).
        p = p * pl.reciprocal(jnp.sum(p, axis=-1, keepdims=True), approx=True)
        attn_rows.append(jnp.dot(p, vb, preferred_element_type=jnp.float32))
    attn = jnp.concatenate(attn_rows, axis=0)                      # [B*S, H]
    attn = jnp.dot(attn, wo, preferred_element_type=jnp.float32)

    h = _layernorm(x + attn, g1, be1)                              # [B*S, H]

    f = jnp.dot(h, w1, preferred_element_type=jnp.float32) + b1    # [B*S, FF]
    f = jnp.maximum(f, 0.0)
    f = jnp.dot(f, w2, preferred_element_type=jnp.float32) + b2    # [B*S, H]

    h = _layernorm(h + f, g2, be2)                                 # [B*S, H]

    # Pooling matmul folds mean-pool (1/S entries) + batch pad-to-8 into one MXU op.
    pooled = jnp.dot(pool, h, preferred_element_type=jnp.float32)  # [BPAD, H]

    # ---- classifier head: F.relu(self.out_layer(x)), full (8,128) unmasked store ----
    logits = jnp.dot(pooled, wout, preferred_element_type=jnp.float32) + bout
    out_ref[...] = jnp.maximum(logits, 0.0)                        # [BPAD, LPAD]


def pack_params(params):
    """One-time packing of the 14 parameter arrays into a single aligned slab.

    Called once at model init, OUTSIDE the per-call jit path.
    """
    (wq, wk, wv, wo, w1, b1, w2, b2, g1, be1, g2, be2, wout, bout) = params
    slab = jnp.zeros((SLAB_ROWS, SLAB_COLS), jnp.float32)

    # weight block (rows 0:H), every field starting at a 128-col boundary
    slab = slab.at[0:H, C_WOUT:C_WOUT + L].set(wout)                    # padded to 128
    slab = slab.at[0:H, C_WQKV:C_WQKV + H].set(wq * (1.0 / float(H) ** 0.5))
    slab = slab.at[0:H, C_WQKV + H:C_WQKV + 2 * H].set(wk)
    slab = slab.at[0:H, C_WQKV + 2 * H:C_WQKV + 3 * H].set(wv)
    slab = slab.at[0:H, C_WO:C_WO + H].set(wo)
    slab = slab.at[0:H, C_W1:C_W1 + FF].set(w1)
    # w2 block
    slab = slab.at[R_W2:R_W2 + FF, 0:H].set(w2)
    # bias / LN rows (each field on its own row at column 0)
    slab = slab.at[R_BOUT, 0:L].set(bout[0])                            # padded to 128
    slab = slab.at[R_B1, 0:FF].set(b1[0])
    slab = slab.at[R_B2, 0:H].set(b2[0])
    slab = slab.at[R_G1, 0:H].set(g1[0])
    slab = slab.at[R_BE1, 0:H].set(be1[0])
    slab = slab.at[R_G2, 0:H].set(g2[0])
    slab = slab.at[R_BE2, 0:H].set(be2[0])
    # pooling matrix: pooled_pad = pool @ h, entries 1/S (mean fold), batch padded to 8
    pm = jnp.zeros((BPAD, B * S), jnp.float32)
    for b in range(B):
        pm = pm.at[b, b * S:(b + 1) * S].set(1.0 / S)
    slab = slab.at[R_POOL:R_POOL + BPAD, C_POOL:C_POOL + B * S].set(pm)
    return slab


_COST = pl.CostEstimate(
    flops=2 * (B * S * H * H3            # fused QKV
               + 2 * B * S * S * H       # scores + attn*v
               + B * S * H * H           # wo
               + 2 * B * S * H * FF      # FFN
               + BPAD * B * S * H        # pooling matmul
               + BPAD * H * LPAD),       # classifier head
    transcendentals=B * S * S + 3 * B * S,   # exp + 2x rsqrt + recip
    bytes_accessed=4 * (B * S * H + SLAB_ROWS * SLAB_COLS + BPAD * LPAD),
)


@jax.jit
def transformer_classifier(emb, slab):
    """emb: [B, S, H] token embeddings; slab: pre-packed parameter slab."""
    x2d = emb.reshape(B * S, H)          # metadata-only reshape in the wrapper
    vmem = pl.BlockSpec(memory_space=pltpu.MemorySpace.VMEM)
    out = pl.pallas_call(
        transformer_classifier_kernel,
        out_shape=jax.ShapeDtypeStruct((BPAD, LPAD), jnp.float32),
        in_specs=[vmem, vmem],
        out_specs=vmem,
        cost_estimate=_COST,
    )(x2d, slab)
    return out[:B, :L]


# ---------------- pure-JAX reference for verification ----------------
def reference(emb, params):
    (wq, wk, wv, wo, w1, b1, w2, b2, g1, be1, g2, be2, wout, bout) = params
    x = emb.astype(jnp.float32)
    q = jnp.einsum("bsh,hd->bsd", x, wq)
    k = jnp.einsum("bsh,hd->bsd", x, wk)
    v = jnp.einsum("bsh,hd->bsd", x, wv)
    s = jnp.einsum("bqd,bkd->bqk", q, k) / jnp.sqrt(float(H))
    p = jax.nn.softmax(s, axis=-1)
    attn = jnp.einsum("bqk,bkd->bqd", p, v)
    attn = jnp.einsum("bsd,dh->bsh", attn, wo)

    def ln(x, g, b):
        mu = jnp.mean(x, axis=-1, keepdims=True)
        var = jnp.mean((x - mu) ** 2, axis=-1, keepdims=True)
        return (x - mu) * jax.lax.rsqrt(var + EPS) * g + b

    h = ln(x + attn, g1, be1)
    f = jnp.maximum(jnp.einsum("bsh,hf->bsf", h, w1) + b1, 0.0)
    f = jnp.einsum("bsf,fh->bsh", f, w2) + b2
    h = ln(h + f, g2, be2)
    pooled = jnp.mean(h, axis=1)
    return jnp.maximum(pooled @ wout + bout, 0.0)


def init_params(key):
    ks = jax.random.split(key, 16)

    def lin(k, fan_in, shape):
        bound = 1.0 / jnp.sqrt(float(fan_in))
        return jax.random.uniform(k, shape, jnp.float32, -bound, bound)

    wq = lin(ks[0], H, (H, H))
    wk = lin(ks[1], H, (H, H))
    wv = lin(ks[2], H, (H, H))
    wo = lin(ks[3], H, (H, H))
    w1 = lin(ks[4], H, (H, FF))
    b1 = lin(ks[5], H, (1, FF))
    w2 = lin(ks[6], FF, (FF, H))
    b2 = lin(ks[7], FF, (1, H))
    g1 = jnp.ones((1, H), jnp.float32)
    be1 = jnp.zeros((1, H), jnp.float32)
    g2 = jnp.ones((1, H), jnp.float32)
    be2 = jnp.zeros((1, H), jnp.float32)
    wout = lin(ks[8], H, (H, L))      # nn.Linear(hidden_size, label_count).weight^T
    bout = lin(ks[9], H, (1, L))      # nn.Linear bias
    return (wq, wk, wv, wo, w1, b1, w2, b2, g1, be1, g2, be2, wout, bout)


if __name__ == "__main__":
    key = jax.random.PRNGKey(0)
    k_emb, k_par = jax.random.split(key)
    emb = jax.random.normal(k_emb, (B, S, H), jnp.float32)   # text_feats -> token embeddings
    params = init_params(k_par)

    # One-time parameter packing at init (hoisted out of the per-call path).
    slab = jax.block_until_ready(pack_params(params))

    out = jax.block_until_ready(transformer_classifier(emb, slab))
    ref = reference(emb, params)

    assert out.shape == (B, L)
    # Tolerance absorbs the EUP approximate-reciprocal used for the in-kernel softmax.
    assert jnp.allclose(out, ref, rtol=1e-2, atol=1e-2), (out, ref)
    print("KERNEL_OK")
</pallas_src>

<mosaic_0001>
module attributes {stable_mosaic.version = 11 : i64} {
  func.func @transformer_classifier_kernel(%arg0: memref<16x32xf32, #tpu.memory_space<vmem>>, %arg1: memref<104x512xf32, #tpu.memory_space<vmem>>, %arg2: memref<8x128xf32, #tpu.memory_space<vmem>>) attributes {dimension_semantics = [], scalar_prefetch = 0 : i64, scratch_operands = 0 : i64, tpu.core_type = #tpu.core_type<tc>} {
    %c0 = arith.constant 0 : index
    %c0_0 = arith.constant 0 : index
    %0 = vector.load %arg0[%c0, %c0_0] : memref<16x32xf32, #tpu.memory_space<vmem>>, vector<16x32xf32>
    %c0_1 = arith.constant 0 : index
    %c128 = arith.constant 128 : index
    %1 = vector.load %arg1[%c0_1, %c128] : memref<104x512xf32, #tpu.memory_space<vmem>>, vector<32x96xf32>
    %c0_2 = arith.constant 0 : index
    %c256 = arith.constant 256 : index
    %2 = vector.load %arg1[%c0_2, %c256] : memref<104x512xf32, #tpu.memory_space<vmem>>, vector<32x32xf32>
    %c0_3 = arith.constant 0 : index
    %c384 = arith.constant 384 : index
    %3 = vector.load %arg1[%c0_3, %c384] : memref<104x512xf32, #tpu.memory_space<vmem>>, vector<32x64xf32>
    %c0_4 = arith.constant 0 : index
    %c0_5 = arith.constant 0 : index
    %4 = vector.load %arg1[%c0_4, %c0_5] : memref<104x512xf32, #tpu.memory_space<vmem>>, vector<32x128xf32>
    %c32 = arith.constant 32 : index
    %c0_6 = arith.constant 0 : index
    %5 = vector.load %arg1[%c32, %c0_6] : memref<104x512xf32, #tpu.memory_space<vmem>>, vector<64x32xf32>
    %c96 = arith.constant 96 : index
    %c0_7 = arith.constant 0 : index
    %6 = vector.load %arg1[%c96, %c0_7] : memref<104x512xf32, #tpu.memory_space<vmem>>, vector<1x128xf32>
    %c97 = arith.constant 97 : index
    %c0_8 = arith.constant 0 : index
    %7 = vector.load %arg1[%c97, %c0_8] : memref<104x512xf32, #tpu.memory_space<vmem>>, vector<1x64xf32>
    %c98 = arith.constant 98 : index
    %c0_9 = arith.constant 0 : index
    %8 = vector.load %arg1[%c98, %c0_9] : memref<104x512xf32, #tpu.memory_space<vmem>>, vector<1x32xf32>
    %c99 = arith.constant 99 : index
    %c0_10 = arith.constant 0 : index
    %9 = vector.load %arg1[%c99, %c0_10] : memref<104x512xf32, #tpu.memory_space<vmem>>, vector<1x32xf32>
    %c100 = arith.constant 100 : index
    %c0_11 = arith.constant 0 : index
    %10 = vector.load %arg1[%c100, %c0_11] : memref<104x512xf32, #tpu.memory_space<vmem>>, vector<1x32xf32>
    %c101 = arith.constant 101 : index
    %c0_12 = arith.constant 0 : index
    %11 = vector.load %arg1[%c101, %c0_12] : memref<104x512xf32, #tpu.memory_space<vmem>>, vector<1x32xf32>
    %c102 = arith.constant 102 : index
    %c0_13 = arith.constant 0 : index
    %12 = vector.load %arg1[%c102, %c0_13] : memref<104x512xf32, #tpu.memory_space<vmem>>, vector<1x32xf32>
    %c96_14 = arith.constant 96 : index
    %c128_15 = arith.constant 128 : index
    %13 = vector.load %arg1[%c96_14, %c128_15] : memref<104x512xf32, #tpu.memory_space<vmem>>, vector<8x16xf32>
    %cst = arith.constant dense<0.000000e+00> : vector<16x96xf32>
    %14 = tpu.matmul %0, %1, %cst {dimension_numbers = #tpu.dot_dimension_numbers<[1], [0], [0], [1], [0, 0, 1, 1], [], []>} : vector<16x32xf32>, vector<32x96xf32>, vector<16x96xf32> -> vector<16x96xf32>
    %15 = vector.extract_strided_slice %14 {offsets = [0, 0], sizes = [8, 32], strides = [1, 1]} : vector<16x96xf32> to vector<8x32xf32>
    %16 = vector.extract_strided_slice %14 {offsets = [0, 32], sizes = [8, 32], strides = [1, 1]} : vector<16x96xf32> to vector<8x32xf32>
    %17 = vector.extract_strided_slice %14 {offsets = [0, 64], sizes = [8, 32], strides = [1, 1]} : vector<16x96xf32> to vector<8x32xf32>
    %cst_16 = arith.constant dense<0.000000e+00> : vector<8x8xf32>
    %18 = tpu.matmul %15, %16, %cst_16 {dimension_numbers = #tpu.dot_dimension_numbers<[1], [1], [0], [0], [0, 0, 1, 0], [], []>} : vector<8x32xf32>, vector<8x32xf32>, vector<8x8xf32> -> vector<8x8xf32>
    %cst_17 = arith.constant dense<0xFF800000> : vector<8xf32>
    %19 = vector.multi_reduction <maximumf>, %18, %cst_17 [1] : vector<8x8xf32> to vector<8xf32>
    %20 = vector.shape_cast %19 : vector<8xf32> to vector<8x1xf32>
    %21 = vector.broadcast %20 : vector<8x1xf32> to vector<8x8xf32>
    %22 = arith.subf %18, %21 : vector<8x8xf32>
    %23 = math.exp %22 : vector<8x8xf32>
    %cst_18 = arith.constant dense<0.000000e+00> : vector<8xf32>
    %24 = vector.multi_reduction <add>, %23, %cst_18 [1] : vector<8x8xf32> to vector<8xf32>
    %25 = vector.shape_cast %24 : vector<8xf32> to vector<8x1xf32>
    %26 = tpu.reciprocal %25 {approx = true} : vector<8x1xf32> -> vector<8x1xf32>
    %27 = vector.broadcast %26 : vector<8x1xf32> to vector<8x8xf32>
    %28 = arith.mulf %23, %27 : vector<8x8xf32>
    %cst_19 = arith.constant dense<0.000000e+00> : vector<8x32xf32>
    %29 = tpu.matmul %28, %17, %cst_19 {dimension_numbers = #tpu.dot_dimension_numbers<[1], [0], [0], [1], [0, 0, 1, 1], [], []>} : vector<8x8xf32>, vector<8x32xf32>, vector<8x32xf32> -> vector<8x32xf32>
    %30 = vector.extract_strided_slice %14 {offsets = [8, 0], sizes = [8, 32], strides = [1, 1]} : vector<16x96xf32> to vector<8x32xf32>
    %31 = vector.extract_strided_slice %14 {offsets = [8, 32], sizes = [8, 32], strides = [1, 1]} : vector<16x96xf32> to vector<8x32xf32>
    %32 = vector.extract_strided_slice %14 {offsets = [8, 64], sizes = [8, 32], strides = [1, 1]} : vector<16x96xf32> to vector<8x32xf32>
    %cst_20 = arith.constant dense<0.000000e+00> : vector<8x8xf32>
    %33 = tpu.matmul %30, %31, %cst_20 {dimension_numbers = #tpu.dot_dimension_numbers<[1], [1], [0], [0], [0, 0, 1, 0], [], []>} : vector<8x32xf32>, vector<8x32xf32>, vector<8x8xf32> -> vector<8x8xf32>
    %cst_21 = arith.constant dense<0xFF800000> : vector<8xf32>
    %34 = vector.multi_reduction <maximumf>, %33, %cst_21 [1] : vector<8x8xf32> to vector<8xf32>
    %35 = vector.shape_cast %34 : vector<8xf32> to vector<8x1xf32>
    %36 = vector.broadcast %35 : vector<8x1xf32> to vector<8x8xf32>
    %37 = arith.subf %33, %36 : vector<8x8xf32>
    %38 = math.exp %37 : vector<8x8xf32>
    %cst_22 = arith.constant dense<0.000000e+00> : vector<8xf32>
    %39 = vector.multi_reduction <add>, %38, %cst_22 [1] : vector<8x8xf32> to vector<8xf32>
    %40 = vector.shape_cast %39 : vector<8xf32> to vector<8x1xf32>
    %41 = tpu.reciprocal %40 {approx = true} : vector<8x1xf32> -> vector<8x1xf32>
    %42 = vector.broadcast %41 : vector<8x1xf32> to vector<8x8xf32>
    %43 = arith.mulf %38, %42 : vector<8x8xf32>
    %cst_23 = arith.constant dense<0.000000e+00> : vector<8x32xf32>
    %44 = tpu.matmul %43, %32, %cst_23 {dimension_numbers = #tpu.dot_dimension_numbers<[1], [0], [0], [1], [0, 0, 1, 1], [], []>} : vector<8x8xf32>, vector<8x32xf32>, vector<8x32xf32> -> vector<8x32xf32>
    %45 = tpu.concatenate %29, %44 in 0 : vector<8x32xf32>, vector<8x32xf32> -> vector<16x32xf32>
    %cst_24 = arith.constant dense<0.000000e+00> : vector<16x32xf32>
    %46 = tpu.matmul %45, %2, %cst_24 {dimension_numbers = #tpu.dot_dimension_numbers<[1], [0], [0], [1], [0, 0, 1, 1], [], []>} : vector<16x32xf32>, vector<32x32xf32>, vector<16x32xf32> -> vector<16x32xf32>
    %47 = arith.addf %0, %46 : vector<16x32xf32>
    %cst_25 = arith.constant dense<0.000000e+00> : vector<16xf32>
    %48 = vector.multi_reduction <add>, %47, %cst_25 [1] : vector<16x32xf32> to vector<16xf32>
    %49 = vector.shape_cast %48 : vector<16xf32> to vector<16x1xf32>
    %cst_26 = arith.constant 3.200000e+01 : f32
    %50 = vector.broadcast %cst_26 : f32 to vector<16x1xf32>
    %51 = arith.divf %49, %50 : vector<16x1xf32>
    %52 = vector.broadcast %51 : vector<16x1xf32> to vector<16x32xf32>
    %53 = arith.subf %47, %52 : vector<16x32xf32>
    %54 = arith.mulf %53, %53 : vector<16x32xf32>
    %cst_27 = arith.constant dense<0.000000e+00> : vector<16xf32>
    %55 = vector.multi_reduction <add>, %54, %cst_27 [1] : vector<16x32xf32> to vector<16xf32>
    %56 = vector.shape_cast %55 : vector<16xf32> to vector<16x1xf32>
    %cst_28 = arith.constant 3.200000e+01 : f32
    %57 = vector.broadcast %cst_28 : f32 to vector<16x1xf32>
    %58 = arith.divf %56, %57 : vector<16x1xf32>
    %59 = vector.broadcast %51 : vector<16x1xf32> to vector<16x32xf32>
    %60 = arith.subf %47, %59 : vector<16x32xf32>
    %cst_29 = arith.constant 9.99999974E-6 : f32
    %61 = vector.broadcast %cst_29 : f32 to vector<16x1xf32>
    %62 = arith.addf %58, %61 : vector<16x1xf32>
    %63 = math.rsqrt %62 : vector<16x1xf32>
    %64 = vector.broadcast %63 : vector<16x1xf32> to vector<16x32xf32>
    %65 = arith.mulf %60, %64 : vector<16x32xf32>
    %66 = vector.broadcast %9 : vector<1x32xf32> to vector<16x32xf32>
    %67 = arith.mulf %65, %66 : vector<16x32xf32>
    %68 = vector.broadcast %10 : vector<1x32xf32> to vector<16x32xf32>
    %69 = arith.addf %67, %68 : vector<16x32xf32>
    %cst_30 = arith.constant dense<0.000000e+00> : vector<16x64xf32>
    %70 = tpu.matmul %69, %3, %cst_30 {dimension_numbers = #tpu.dot_dimension_numbers<[1], [0], [0], [1], [0, 0, 1, 1], [], []>} : vector<16x32xf32>, vector<32x64xf32>, vector<16x64xf32> -> vector<16x64xf32>
    %71 = vector.broadcast %7 : vector<1x64xf32> to vector<16x64xf32>
    %72 = arith.addf %70, %71 : vector<16x64xf32>
    %cst_31 = arith.constant 0.000000e+00 : f32
    %73 = vector.broadcast %cst_31 : f32 to vector<16x64xf32>
    %74 = arith.maximumf %72, %73 : vector<16x64xf32>
    %cst_32 = arith.constant dense<0.000000e+00> : vector<16x32xf32>
    %75 = tpu.matmul %74, %5, %cst_32 {dimension_numbers = #tpu.dot_dimension_numbers<[1], [0], [0], [1], [0, 0, 1, 1], [], []>} : vector<16x64xf32>, vector<64x32xf32>, vector<16x32xf32> -> vector<16x32xf32>
    %76 = vector.broadcast %8 : vector<1x32xf32> to vector<16x32xf32>
    %77 = arith.addf %75, %76 : vector<16x32xf32>
    %78 = arith.addf %69, %77 : vector<16x32xf32>
    %cst_33 = arith.constant dense<0.000000e+00> : vector<16xf32>
    %79 = vector.multi_reduction <add>, %78, %cst_33 [1] : vector<16x32xf32> to vector<16xf32>
    %80 = vector.shape_cast %79 : vector<16xf32> to vector<16x1xf32>
    %cst_34 = arith.constant 3.200000e+01 : f32
    %81 = vector.broadcast %cst_34 : f32 to vector<16x1xf32>
    %82 = arith.divf %80, %81 : vector<16x1xf32>
    %83 = vector.broadcast %82 : vector<16x1xf32> to vector<16x32xf32>
    %84 = arith.subf %78, %83 : vector<16x32xf32>
    %85 = arith.mulf %84, %84 : vector<16x32xf32>
    %cst_35 = arith.constant dense<0.000000e+00> : vector<16xf32>
    %86 = vector.multi_reduction <add>, %85, %cst_35 [1] : vector<16x32xf32> to vector<16xf32>
    %87 = vector.shape_cast %86 : vector<16xf32> to vector<16x1xf32>
    %cst_36 = arith.constant 3.200000e+01 : f32
    %88 = vector.broadcast %cst_36 : f32 to vector<16x1xf32>
    %89 = arith.divf %87, %88 : vector<16x1xf32>
    %90 = vector.broadcast %82 : vector<16x1xf32> to vector<16x32xf32>
    %91 = arith.subf %78, %90 : vector<16x32xf32>
    %cst_37 = arith.constant 9.99999974E-6 : f32
    %92 = vector.broadcast %cst_37 : f32 to vector<16x1xf32>
    %93 = arith.addf %89, %92 : vector<16x1xf32>
    %94 = math.rsqrt %93 : vector<16x1xf32>
    %95 = vector.broadcast %94 : vector<16x1xf32> to vector<16x32xf32>
    %96 = arith.mulf %91, %95 : vector<16x32xf32>
    %97 = vector.broadcast %11 : vector<1x32xf32> to vector<16x32xf32>
    %98 = arith.mulf %96, %97 : vector<16x32xf32>
    %99 = vector.broadcast %12 : vector<1x32xf32> to vector<16x32xf32>
    %100 = arith.addf %98, %99 : vector<16x32xf32>
    %cst_38 = arith.constant dense<0.000000e+00> : vector<8x32xf32>
    %101 = tpu.matmul %13, %100, %cst_38 {dimension_numbers = #tpu.dot_dimension_numbers<[1], [0], [0], [1], [0, 0, 1, 1], [], []>} : vector<8x16xf32>, vector<16x32xf32>, vector<8x32xf32> -> vector<8x32xf32>
    %cst_39 = arith.constant dense<0.000000e+00> : vector<8x128xf32>
    %102 = tpu.matmul %101, %4, %cst_39 {dimension_numbers = #tpu.dot_dimension_numbers<[1], [0], [0], [1], [0, 0, 1, 1], [], []>} : vector<8x32xf32>, vector<32x128xf32>, vector<8x128xf32> -> vector<8x128xf32>
    %103 = vector.broadcast %6 : vector<1x128xf32> to vector<8x128xf32>
    %104 = arith.addf %102, %103 : vector<8x128xf32>
    %cst_40 = arith.constant 0.000000e+00 : f32
    %105 = vector.broadcast %cst_40 : f32 to vector<8x128xf32>
    %106 = arith.maximumf %104, %105 : vector<8x128xf32>
    %c0_41 = arith.constant 0 : index
    %c0_42 = arith.constant 0 : index
    %107 = vector.load %arg2[%c0_41, %c0_42] : memref<8x128xf32, #tpu.memory_space<vmem>>, vector<8x128xf32>
    tpu.vector_store %arg2[%c0_41, %c0_42], %106 {strides = array<i32>} : memref<8x128xf32, #tpu.memory_space<vmem>>, vector<8x128xf32>,
    return
  }
}

</mosaic_0001>

<llo_original>
// kernel: transformer_classifier.1
$region0: #{transformer_classifier.1}
  #allocation0 [shape = 'u32[]', space=smem, size = 0x4, offset = 0x4, fixed_abs, tag = 'smem constant byte address 0x4 - core index']
  #allocation1 [shape = 'u32[72,128]{1,0:T(1,128)}', space=vmem, size = 0x9000, scoped, tag = 'internal scratch']
  %s0 = inlined_call_operand.hbm [shape: f32[16,32], index: 0, kind: input, shape index: {}]
  %s1 = inlined_call_operand.hbm [shape: f32[104,512], index: 1, kind: input, shape index: {}]
  %s2 = inlined_call_operand.vmem [shape: f32[8,128], index: 2, kind: output, shape index: {}]
  %s3 = sld [smem:[#allocation0]]
  $region26: #{transformer_classifier.1} parent=0
    _
  %s5 = ssub.s32 1, %s3
  %s6 = scalar_select 0, %s5, %s3
  $region1: #{transformer_classifier.1} parent=0
    #allocation2 [shape = 'u8[8192]{0}', space=vmem, size = 0x2000, scoped, tag = 'input window, operand 0, single buffered']
    #allocation3 [shape = 's32[1]{0}', space=sflag, size = 0x4, scoped, tag = 'scoped memory for transformer_classifier.1']
    #allocation4 [shape = 'u8[212992]{0}', space=vmem, size = 0x34000, scoped, tag = 'input window, operand 1, single buffered']
    #allocation5 [shape = 's32[1]{0}', space=sflag, size = 0x4, scoped, tag = 'scoped memory for transformer_classifier.1']
    %7 = vsyncpa [#allocation3], 0
    %8 = vsyncpa [#allocation5], 0
    // Predicated region
    $region2: #{transformer_classifier.1} parent=1 // pred_check
      _
    $region3: #{transformer_classifier.1} parent=1 // pred_check_branch
      %10 = sbr.rel (0) target = $region5
    $region4: #{transformer_classifier.1} parent=1 // pred_region
      %12 = vsyncadd [#allocation3], 0
      %s13 = sshll.u32 %s0, 4
      %s14 = int_to_ptr.hbm [resolvable:$true] %s13
      %s15 = sshll.u32 [#allocation2], 4
      %s16 = int_to_ptr.vmem [resolvable:$true] %s15
      %21 = dma.hbm_to_vmem [thread:$0]  %s14, 256, %s16, [#allocation3], 128, 128, 8
    $region5: #{transformer_classifier.1} parent=1 // pred_fallthru
      _
    // Predicated region
    $region6: #{transformer_classifier.1} parent=1 // pred_check
      _
    $region7: #{transformer_classifier.1} parent=1 // pred_check_branch
      %23 = sbr.rel (0) target = $region9
    $region8: #{transformer_classifier.1} parent=1 // pred_region
      %25 = vsyncadd [#allocation5], 0
      %s26 = sshll.u32 %s1, 4
      %s27 = int_to_ptr.hbm [resolvable:$true] %s26
      %s28 = sshll.u32 [#allocation4], 4
      %s29 = int_to_ptr.vmem [resolvable:$true] %s28
      %34 = dma.hbm_to_vmem [thread:$0]  %s27, 6656, %s29, [#allocation5], 512, 512, 32
    $region9: #{transformer_classifier.1} parent=1 // pred_fallthru
      _
    // Predicated region
    $region10: #{transformer_classifier.1} parent=1 // pred_check
      _
    $region11: #{transformer_classifier.1} parent=1 // pred_check_branch
      %36 = sbr.rel (0) target = $region13
    $region12: #{transformer_classifier.1} parent=1 // pred_region
      %38 = dma.done [#allocation3], 256
    $region13: #{transformer_classifier.1} parent=1 // pred_fallthru
      _
    // Predicated region
    $region14: #{transformer_classifier.1} parent=1 // pred_check
      _
    $region15: #{transformer_classifier.1} parent=1 // pred_check_branch
      %40 = sbr.rel (0) target = $region17
    $region16: #{transformer_classifier.1} parent=1 // pred_region
      %42 = dma.done [#allocation5], 6656
    $region17: #{transformer_classifier.1} parent=1 // pred_fallthru
      _
    %v43 = vld [vmem:[#allocation2] sm:$0xff]
    %v44 = vld [vmem:[#allocation2 + $0x8] sm:$0xff]
    %v45 = vld [vmem:[#allocation4 + $0x8] sm:$0xff]
    %v46 = vld [vmem:[#allocation4 + $0x28] sm:$0xff]
    %v47 = vld [vmem:[#allocation4 + $0x48] sm:$0xff]
    %v48 = vld [vmem:[#allocation4 + $0x68] sm:$0xff]
    %v49 = vld [vmem:[#allocation4 + $0x10] sm:$0xff]
    %v50 = vld [vmem:[#allocation4 + $0x30] sm:$0xff]
    %v51 = vld [vmem:[#allocation4 + $0x50] sm:$0xff]
    %v52 = vld [vmem:[#allocation4 + $0x70] sm:$0xff]
    %v53 = vld [vmem:[#allocation4 + $0x18] sm:$0xff]
    %v54 = vld [vmem:[#allocation4 + $0x38] sm:$0xff]
    %v55 = vld [vmem:[#allocation4 + $0x58] sm:$0xff]
    %v56 = vld [vmem:[#allocation4 + $0x78] sm:$0xff]
    %v57 = vld [vmem:[#allocation4] sm:$0xff]
    %v58 = vld [vmem:[#allocation4 + $0x20] sm:$0xff]
    %v59 = vld [vmem:[#allocation4 + $0x40] sm:$0xff]
    %v60 = vld [vmem:[#allocation4 + $0x60] sm:$0xff]
    %v61 = vld [vmem:[#allocation4 + $0x80] sm:$0xff]
    %v62 = vld [vmem:[#allocation4 + $0xa0] sm:$0xff]
    %v63 = vld [vmem:[#allocation4 + $0xc0] sm:$0xff]
    %v64 = vld [vmem:[#allocation4 + $0xe0] sm:$0xff]
    %v65 = vld [vmem:[#allocation4 + $0x100] sm:$0xff]
    %v66 = vld [vmem:[#allocation4 + $0x120] sm:$0xff]
    %v67 = vld [vmem:[#allocation4 + $0x140] sm:$0xff]
    %v68 = vld [vmem:[#allocation4 + $0x160] sm:$0xff]
    %v69 = vld [vmem:[#allocation4 + $0x180] ss:$0 sm:$0xff]
    %v70 = vld [vmem:[#allocation4 + $0x181] ss:$0 sm:$0xff]
    %v71 = vld [vmem:[#allocation4 + $0x182] ss:$0 sm:$0xff]
    %v72 = vld [vmem:[#allocation4 + $0x183] ss:$0 sm:$0xff]
    %v73 = vld [vmem:[#allocation4 + $0x184] ss:$0 sm:$0xff]
    %v74 = vld [vmem:[#allocation4 + $0x185] ss:$0 sm:$0xff]
    %v75 = vld [vmem:[#allocation4 + $0x186] ss:$0 sm:$0xff]
    %v76 = vld [vmem:[#allocation4 + $0x188] sm:$0xff]
    %vm77 = vcmask 261120
    %v79 = vsel %vm77, %v43, 0
    %v82 = vsel %vm77, %v44, 0
    %84 = vmatpush.msra.mxu0 0.0
    %85 = vmatpush.msra.mxu0 0.0
    %86 = vmatpush.msra.mxu0 0.0
    %87 = vmatpush.msra.mxu0 0.0
    %88 = vmatpush.msra.mxu0 0.0
    %89 = vmatpush.msra.mxu0 0.0
    %90 = vmatpush.msra.mxu0 0.0
    %91 = vmatpush.msra.mxu0 0.0
    %92 = vmatpush.msra.mxu0 0.0
    %93 = vmatpush.msra.mxu0 0.0
    %94 = vmatpush.msra.mxu0 0.0
    %95 = vmatpush.msra.mxu0 0.0
    %96 = vmatpush.msra.mxu0 %v48
    %97 = vmatpush.msra.mxu0 %v47
    %98 = vmatpush.msra.mxu0 %v46
    %99 = vmatpush.msra.mxu0 %v45
    %100 = vmatmul.f32.gmra.mxu0 %v79
    %v101 = vpop.f32.mrf.mxu0
    %v102 = vadd.f32 0.0, %v101
    %103 = vmatmul.f32.gmra.mxu0 %v82
    %v104 = vpop.f32.mrf.mxu0
    %v105 = vadd.f32 0.0, %v104
    %106 = vdwg.mxu0
    %108 = vrot.lane.b32.xlu0 %v102, 96
    %v109 = vpop.permute.xlu0 %108
    %v110 = vsel %vm77, %v102, 0
    %v112 = vsel %vm77, %v109, 0
    %114 = vmatpush.xpose.msra.mxu0 0.0
    %115 = vmatpush.xpose.msra.mxu0 0.0
    %116 = vmatpush.xpose.msra.mxu0 0.0
    %117 = vmatpush.xpose.msra.mxu0 0.0
    %118 = vmatpush.xpose.msra.mxu0 0.0
    %119 = vmatpush.xpose.msra.mxu0 0.0
    %120 = vmatpush.xpose.msra.mxu0 0.0
    %121 = vmatpush.xpose.msra.mxu0 0.0
    %122 = vmatpush.xpose.msra.mxu0 0.0
    %123 = vmatpush.xpose.msra.mxu0 0.0
    %124 = vmatpush.xpose.msra.mxu0 0.0
    %125 = vmatpush.xpose.msra.mxu0 0.0
    %126 = vmatpush.xpose.msra.mxu0 0.0
    %127 = vmatpush.xpose.msra.mxu0 0.0
    %128 = vmatpush.xpose.msra.mxu0 0.0
    %129 = vmatpush.xpose.msra.mxu0 %v112
    %130 = vmatmul.f32.gmra.mxu0 %v110
    %v131 = vpop.f32.mrf.mxu0
    %v132 = vadd.f32 0.0, %v131
    %133 = vdwg.mxu0
    %vm134 = vcmask 64512
    %v135 = vsel %vm134, %v132, -inf
    %136 = vmax.xlane.f32.xlu0 %v135
    %v137 = vpop.xlane.xlu0 %136
    %v138 = vsub.f32 %v132, %v137
    %v139 = vmul.f32 %v138, 1.442695
    %v140 = vpow.pop %v139
    %v141 = vsel %vm134, %v140, 0.0
    %142 = vadd.xlane.f32.xlu0 %v141
    %v143 = vpop.xlane.xlu0 %142
    %v144 = vrcp.pop %v143
    %v145 = vmul.f32 %v140, %v144
    %146 = vrot.lane.b32.xlu0 %v102, 64
    %v147 = vpop.permute.xlu0 %146
    %v150 = vsel %vm134, %v145, 0
    %152 = vmatpush.msra.mxu0 0.0
    %153 = vmatpush.msra.mxu0 0.0
    %154 = vmatpush.msra.mxu0 0.0
    %155 = vmatpush.msra.mxu0 0.0
    %156 = vmatpush.msra.mxu0 0.0
    %157 = vmatpush.msra.mxu0 0.0
    %158 = vmatpush.msra.mxu0 0.0
    %159 = vmatpush.msra.mxu0 0.0
    %160 = vmatpush.msra.mxu0 0.0
    %161 = vmatpush.msra.mxu0 0.0
    %162 = vmatpush.msra.mxu0 0.0
    %163 = vmatpush.msra.mxu0 0.0
    %164 = vmatpush.msra.mxu0 0.0
    %165 = vmatpush.msra.mxu0 0.0
    %166 = vmatpush.msra.mxu0 0.0
    %167 = vmatpush.msra.mxu0 %v147
    %168 = vmatmul.f32.gmra.mxu0 %v150
    %v169 = vpop.f32.mrf.mxu0
    %v170 = vadd.f32 0.0, %v169
    %171 = vdwg.mxu0
    %173 = vrot.lane.b32.xlu0 %v105, 96
    %v174 = vpop.permute.xlu0 %173
    %v175 = vsel %vm77, %v105, 0
    %v177 = vsel %vm77, %v174, 0
    %179 = vmatpush.xpose.msra.mxu0 0.0
    %180 = vmatpush.xpose.msra.mxu0 0.0
    %181 = vmatpush.xpose.msra.mxu0 0.0
    %182 = vmatpush.xpose.msra.mxu0 0.0
    %183 = vmatpush.xpose.msra.mxu0 0.0
    %184 = vmatpush.xpose.msra.mxu0 0.0
    %185 = vmatpush.xpose.msra.mxu0 0.0
    %186 = vmatpush.xpose.msra.mxu0 0.0
    %187 = vmatpush.xpose.msra.mxu0 0.0
    %188 = vmatpush.xpose.msra.mxu0 0.0
    %189 = vmatpush.xpose.msra.mxu0 0.0
    %190 = vmatpush.xpose.msra.mxu0 0.0
    %191 = vmatpush.xpose.msra.mxu0 0.0
    %192 = vmatpush.xpose.msra.mxu0 0.0
    %193 = vmatpush.xpose.msra.mxu0 0.0
    %194 = vmatpush.xpose.msra.mxu0 %v177
    %195 = vmatmul.f32.gmra.mxu0 %v175
    %v196 = vpop.f32.mrf.mxu0
    %v197 = vadd.f32 0.0, %v196
    %198 = vdwg.mxu0
    %v199 = vsel %vm134, %v197, -inf
    %200 = vmax.xlane.f32.xlu0 %v199
    %v201 = vpop.xlane.xlu0 %200
    %v202 = vsub.f32 %v197, %v201
    %v203 = vmul.f32 %v202, 1.442695
    %v204 = vpow.pop %v203
    %v205 = vsel %vm134, %v204, 0.0
    %206 = vadd.xlane.f32.xlu0 %v205
    %v207 = vpop.xlane.xlu0 %206
    %v208 = vrcp.pop %v207
    %v209 = vmul.f32 %v204, %v208
    %210 = vrot.lane.b32.xlu0 %v105, 64
    %v211 = vpop.permute.xlu0 %210
    %v214 = vsel %vm134, %v209, 0
    %216 = vmatpush.msra.mxu0 0.0
    %217 = vmatpush.msra.mxu0 0.0
    %218 = vmatpush.msra.mxu0 0.0
    %219 = vmatpush.msra.mxu0 0.0
    %220 = vmatpush.msra.mxu0 0.0
    %221 = vmatpush.msra.mxu0 0.0
    %222 = vmatpush.msra.mxu0 0.0
    %223 = vmatpush.msra.mxu0 0.0
    %224 = vmatpush.msra.mxu0 0.0
    %225 = vmatpush.msra.mxu0 0.0
    %226 = vmatpush.msra.mxu0 0.0
    %227 = vmatpush.msra.mxu0 0.0
    %228 = vmatpush.msra.mxu0 0.0
    %229 = vmatpush.msra.mxu0 0.0
    %230 = vmatpush.msra.mxu0 0.0
    %231 = vmatpush.msra.mxu0 %v211
    %232 = vmatmul.f32.gmra.mxu0 %v214
    %v233 = vpop.f32.mrf.mxu0
    %v234 = vadd.f32 0.0, %v233
    %235 = vdwg.mxu0
    %v237 = vsel %vm77, %v170, 0
    %v240 = vsel %vm77, %v234, 0
    %242 = vmatpush.msra.mxu0 0.0
    %243 = vmatpush.msra.mxu0 0.0
    %244 = vmatpush.msra.mxu0 0.0
    %245 = vmatpush.msra.mxu0 0.0
    %246 = vmatpush.msra.mxu0 0.0
    %247 = vmatpush.msra.mxu0 0.0
    %248 = vmatpush.msra.mxu0 0.0
    %249 = vmatpush.msra.mxu0 0.0
    %250 = vmatpush.msra.mxu0 0.0
    %251 = vmatpush.msra.mxu0 0.0
    %252 = vmatpush.msra.mxu0 0.0
    %253 = vmatpush.msra.mxu0 0.0
    %254 = vmatpush.msra.mxu0 %v52
    %255 = vmatpush.msra.mxu0 %v51
    %256 = vmatpush.msra.mxu0 %v50
    %257 = vmatpush.msra.mxu0 %v49
    %258 = vmatmul.f32.gmra.mxu0 %v237
    %v259 = vpop.f32.mrf.mxu0
    %v260 = vadd.f32 0.0, %v259
    %261 = vmatmul.f32.gmra.mxu0 %v240
    %v262 = vpop.f32.mrf.mxu0
    %v263 = vadd.f32 0.0, %v262
    %264 = vdwg.mxu0
    %v265 = vadd.f32 %v43, %v260
    %v266 = vadd.f32 %v44, %v263
    %v267 = vsel %vm77, %v265, 0.0
    %268 = vadd.xlane.f32.xlu0 %v267
    %v269 = vpop.xlane.xlu0 %268
    %v270 = vsel %vm77, %v266, 0.0
    %271 = vadd.xlane.f32.xlu0 %v270
    %v272 = vpop.xlane.xlu0 %271
    %v273 = vrcp.pop 32.0
    %v274 = vmul.f32 32.0, %v273
    %v275 = vsub.f32 1.0, %v274
    %v276 = vmul.f32 %v273, %v275
    %v277 = vadd.f32 %v273, %v276
    %vm278 = vweird.f32 %v273
    %v279 = vsel %vm278, %v273, %v277
    %v280 = vmul.f32 %v269, %v279
    %v281 = vmul.f32 %v272, %v279
    %v282 = vsub.f32 %v265, %v280
    %v283 = vsub.f32 %v266, %v281
    %v284 = vmul.f32 %v282, %v282
    %v285 = vmul.f32 %v283, %v283
    %v286 = vsel %vm77, %v284, 0.0
    %287 = vadd.xlane.f32.xlu0 %v286
    %v288 = vpop.xlane.xlu0 %287
    %v289 = vsel %vm77, %v285, 0.0
    %290 = vadd.xlane.f32.xlu0 %v289
    %v291 = vpop.xlane.xlu0 %290
    %v292 = vmul.f32 %v288, %v279
    %v293 = vmul.f32 %v291, %v279
    %v294 = vadd.f32 %v292, 1e-05
    %v295 = vadd.f32 %v293, 1e-05
    %v296 = vrsqrt.pop %v294
    %v297 = vmul.f32 %v296, %v294
    %v298 = vmul.f32 %v297, %v296
    %v299 = vmul.f32 0.5, %v298
    %v300 = vsub.f32 1.5, %v299
    %v301 = vmul.f32 %v296, %v300
    %vm302 = vweird.f32 %v294
    %vm303 = vweird.f32 %v296
    %vm304 = vmor %vm302, %vm303
    %v305 = vsel %vm304, %v296, %v301
    %v306 = vrsqrt.pop %v295
    %v307 = vmul.f32 %v306, %v295
    %v308 = vmul.f32 %v307, %v306
    %v309 = vmul.f32 0.5, %v308
    %v310 = vsub.f32 1.5, %v309
    %v311 = vmul.f32 %v306, %v310
    %vm312 = vweird.f32 %v295
    %vm313 = vweird.f32 %v306
    %vm314 = vmor %vm312, %vm313
    %v315 = vsel %vm314, %v306, %v311
    %v316 = vmul.f32 %v282, %v305
    %v317 = vmul.f32 %v283, %v315
    %v318 = vmul.f32 %v316, %v72
    %v319 = vmul.f32 %v317, %v72
    %v320 = vadd.f32 %v318, %v73
    %v321 = vadd.f32 %v319, %v73
    %v323 = vsel %vm77, %v320, 0
    %v326 = vsel %vm77, %v321, 0
    %328 = vmatpush.msra.mxu0 0.0
    %329 = vmatpush.msra.mxu0 0.0
    %330 = vmatpush.msra.mxu0 0.0
    %331 = vmatpush.msra.mxu0 0.0
    %332 = vmatpush.msra.mxu0 0.0
    %333 = vmatpush.msra.mxu0 0.0
    %334 = vmatpush.msra.mxu0 0.0
    %335 = vmatpush.msra.mxu0 0.0
    %336 = vmatpush.msra.mxu0 0.0
    %337 = vmatpush.msra.mxu0 0.0
    %338 = vmatpush.msra.mxu0 0.0
    %339 = vmatpush.msra.mxu0 0.0
    %340 = vmatpush.msra.mxu0 %v56
    %341 = vmatpush.msra.mxu0 %v55
    %342 = vmatpush.msra.mxu0 %v54
    %343 = vmatpush.msra.mxu0 %v53
    %344 = vmatmul.f32.gmra.mxu0 %v323
    %v345 = vpop.f32.mrf.mxu0
    %v346 = vadd.f32 %v70, %v345
    %347 = vmatmul.f32.gmra.mxu0 %v326
    %v348 = vpop.f32.mrf.mxu0
    %v349 = vadd.f32 %v70, %v348
    %350 = vdwg.mxu0
    %v351 = vmax.f32 %v346, 0.0
    %v352 = vmax.f32 %v349, 0.0
    %vm353 = vcmask 523264
    %v355 = vsel %vm353, %v351, 0
    %v358 = vsel %vm353, %v352, 0
    %360 = vmatpush.msra.mxu0 0.0
    %361 = vmatpush.msra.mxu0 0.0
    %362 = vmatpush.msra.mxu0 0.0
    %363 = vmatpush.msra.mxu0 0.0
    %364 = vmatpush.msra.mxu0 0.0
    %365 = vmatpush.msra.mxu0 0.0
    %366 = vmatpush.msra.mxu0 0.0
    %367 = vmatpush.msra.mxu0 0.0
    %368 = vmatpush.msra.mxu0 %v68
    %369 = vmatpush.msra.mxu0 %v67
    %370 = vmatpush.msra.mxu0 %v66
    %371 = vmatpush.msra.mxu0 %v65
    %372 = vmatpush.msra.mxu0 %v64
    %373 = vmatpush.msra.mxu0 %v63
    %374 = vmatpush.msra.mxu0 %v62
    %375 = vmatpush.msra.mxu0 %v61
    %376 = vmatmul.f32.gmra.mxu0 %v355
    %v377 = vpop.f32.mrf.mxu0
    %v378 = vadd.f32 %v71, %v377
    %379 = vmatmul.f32.gmra.mxu0 %v358
    %v380 = vpop.f32.mrf.mxu0
    %v381 = vadd.f32 %v71, %v380
    %382 = vdwg.mxu0
    %v383 = vadd.f32 %v320, %v378
    %v384 = vadd.f32 %v321, %v381
    %v385 = vsel %vm77, %v383, 0.0
    %386 = vadd.xlane.f32.xlu0 %v385
    %v387 = vpop.xlane.xlu0 %386
    %v388 = vsel %vm77, %v384, 0.0
    %389 = vadd.xlane.f32.xlu0 %v388
    %v390 = vpop.xlane.xlu0 %389
    %v391 = vmul.f32 %v387, %v279
    %v392 = vmul.f32 %v390, %v279
    %v393 = vsub.f32 %v383, %v391
    %v394 = vsub.f32 %v384, %v392
    %v395 = vmul.f32 %v393, %v393
    %v396 = vmul.f32 %v394, %v394
    %v397 = vsel %vm77, %v395, 0.0
    %398 = vadd.xlane.f32.xlu0 %v397
    %v399 = vpop.xlane.xlu0 %398
    %v400 = vsel %vm77, %v396, 0.0
    %401 = vadd.xlane.f32.xlu0 %v400
    %v402 = vpop.xlane.xlu0 %401
    %v403 = vmul.f32 %v399, %v279
    %v404 = vmul.f32 %v402, %v279
    %v405 = vadd.f32 %v403, 1e-05
    %v406 = vadd.f32 %v404, 1e-05
    %v407 = vrsqrt.pop %v405
    %v408 = vmul.f32 %v407, %v405
    %v409 = vmul.f32 %v408, %v407
    %v410 = vmul.f32 0.5, %v409
    %v411 = vsub.f32 1.5, %v410
    %v412 = vmul.f32 %v407, %v411
    %vm413 = vweird.f32 %v405
    %vm414 = vweird.f32 %v407
    %vm415 = vmor %vm413, %vm414
    %v416 = vsel %vm415, %v407, %v412
    %v417 = vrsqrt.pop %v406
    %v418 = vmul.f32 %v417, %v406
    %v419 = vmul.f32 %v418, %v417
    %v420 = vmul.f32 0.5, %v419
    %v421 = vsub.f32 1.5, %v420
    %v422 = vmul.f32 %v417, %v421
    %vm423 = vweird.f32 %v406
    %vm424 = vweird.f32 %v417
    %vm425 = vmor %vm423, %vm424
    %v426 = vsel %vm425, %v417, %v422
    %v427 = vmul.f32 %v393, %v416
    %v428 = vmul.f32 %v394, %v426
    %v429 = vmul.f32 %v427, %v74
    %v430 = vmul.f32 %v428, %v74
    %v431 = vadd.f32 %v429, %v75
    %v432 = vadd.f32 %v430, %v75
    %vm433 = vcmask 130048
    %v435 = vsel %vm433, %v76, 0
    %437 = vmatpush.msra.mxu0 0.0
    %438 = vmatpush.msra.mxu0 0.0
    %439 = vmatpush.msra.mxu0 0.0
    %440 = vmatpush.msra.mxu0 0.0
    %441 = vmatpush.msra.mxu0 0.0
    %442 = vmatpush.msra.mxu0 0.0
    %443 = vmatpush.msra.mxu0 0.0
    %444 = vmatpush.msra.mxu0 0.0
    %445 = vmatpush.msra.mxu0 0.0
    %446 = vmatpush.msra.mxu0 0.0
    %447 = vmatpush.msra.mxu0 0.0
    %448 = vmatpush.msra.mxu0 0.0
    %449 = vmatpush.msra.mxu0 0.0
    %450 = vmatpush.msra.mxu0 0.0
    %451 = vmatpush.msra.mxu0 %v432
    %452 = vmatpush.msra.mxu0 %v431
    %453 = vmatmul.f32.gmra.mxu0 %v435
    %v454 = vpop.f32.mrf.mxu0
    %v455 = vadd.f32 0.0, %v454
    %456 = vdwg.mxu0
    %v458 = vsel %vm77, %v455, 0
    %460 = vmatpush.msra.mxu0 0.0
    %461 = vmatpush.msra.mxu0 0.0
    %462 = vmatpush.msra.mxu0 0.0
    %463 = vmatpush.msra.mxu0 0.0
    %464 = vmatpush.msra.mxu0 0.0
    %465 = vmatpush.msra.mxu0 0.0
    %466 = vmatpush.msra.mxu0 0.0
    %467 = vmatpush.msra.mxu0 0.0
    %468 = vmatpush.msra.mxu0 0.0
    %469 = vmatpush.msra.mxu0 0.0
    %470 = vmatpush.msra.mxu0 0.0
    %471 = vmatpush.msra.mxu0 0.0
    %472 = vmatpush.msra.mxu0 %v60
    %473 = vmatpush.msra.mxu0 %v59
    %474 = vmatpush.msra.mxu0 %v58
    %475 = vmatpush.msra.mxu0 %v57
    %476 = vmatmul.f32.gmra.mxu0 %v458
    %v477 = vpop.f32.mrf.mxu0
    %v478 = vadd.f32 %v69, %v477
    %479 = vdwg.mxu0
    %v480 = vmax.f32 %v478, 0.0
    %481 = vst [vmem:[%s2] sm:$0xff] %v480
    // Predicated region
    $region18: #{transformer_classifier.1} parent=1 // pred_check
      _
    $region19: #{transformer_classifier.1} parent=1 // pred_check_branch
      %483 = sbr.rel (0) target = $region21
    $region20: #{transformer_classifier.1} parent=1 // pred_region
      _
    $region21: #{transformer_classifier.1} parent=1 // pred_fallthru
      _
    // Predicated region
    $region22: #{transformer_classifier.1} parent=1 // pred_check
      _
    $region23: #{transformer_classifier.1} parent=1 // pred_check_branch
      %485 = sbr.rel (0) target = $region25
    $region24: #{transformer_classifier.1} parent=1 // pred_region
      _
    $region25: #{transformer_classifier.1} parent=1 // pred_fallthru
      _
    %486 = vsyncpa [#allocation3], 1
    %487 = vsyncpa [#allocation5], 1

</llo_original>
